<compile_context>
chip_gen: v6e
topology: v6e:2x2x1
jax: 0.10.0
libtpu: 0.0.40
codegen_flags: <defaults>
</compile_context>

<pallas_src>
import functools

import jax
import jax.numpy as jnp
from jax import lax
from jax.experimental import pallas as pl
from jax.experimental.pallas import tpu as pltpu


def _round_up(x, m):
    return (x + m - 1) // m * m


def _blind_conv_kernel(x_ref, w_ref, o_ref, p_ref, *, H, Ws, Cin):
    # x_ref: (Cin, (H+3)*Ws) bf16  padded image, rows flattened with stride Ws
    #        (rows: 2 zero rows, H edge-col-padded x rows, 1 zero slack row)
    # w_ref: (Cout, 9*Cin)   bf16  conv taps, K index = (dy*3+dx)*Cin + c
    # o_ref: (Cout, H*Ws)          conv output; column h*Ws + w is valid for w < W
    # p_ref: (9*Cin, H*Ws)   bf16  VMEM scratch holding the im2col patch
    L = H * Ws
    # Stage the 9 shifted views once: each tap is a pure lane slice (no reshape,
    # no per-tap relayout).
    for dy in range(3):
        for dx in range(3):
            tap = dy * 3 + dx
            s = dy * Ws + dx
            p_ref[tap * Cin:(tap + 1) * Cin, :] = x_ref[:, s:s + L]

    # Single fused matmul on the MXU: bf16 inputs, f32 accumulate.
    acc = jnp.dot(w_ref[...], p_ref[...], preferred_element_type=jnp.float32)
    # LeakyReLU(0.1) in f32 on the accumulator.
    acc = jnp.where(acc >= 0, acc, 0.1 * acc)
    # Lane-dense store (last dim is a multiple of 128 for the test shape).
    o_ref[...] = acc.astype(o_ref.dtype)


@jax.jit
def blind_conv(x_nchw, weight):
    """x_nchw: (N, Cin, H, W) float32.  weight: (Cout, Cin, 3, 3) float32."""
    N, Cin, H, W = x_nchw.shape
    Cout = weight.shape[0]

    Ws = _round_up(W + 2, 8)      # padded row stride (lane friendly; 24 for W=16)
    Lp = (H + 3) * Ws             # 2 zero rows on top + 1 zero slack row at bottom

    # --- glue (no transposes, pads fuse into one XLA fusion) -----------------
    xb = x_nchw.astype(jnp.bfloat16)
    # 1-col edge replication (ReplicationPad2d left/right on the original rows)
    xc = jnp.pad(xb, ((0, 0), (0, 0), (0, 0), (1, 1)), mode="edge")
    # 2 zero rows on top (ZeroPad2d row + replicated zero row; final crop means
    # the bottom replicated row is never read), 1 zero slack row at the bottom
    # (so every tap's flat lane-slice stays in bounds), zero-fill to stride Ws.
    xc = jnp.pad(xc, ((0, 0), (0, 0), (2, 1), (0, Ws - (W + 2))))
    x_flat = xc.reshape(N, Cin, Lp)                       # (N, Cin, (H+3)*Ws)

    # Conv2d weight (Cout, Cin, 3, 3) -> (Cout, 9*Cin), K index (dy*3+dx)*Cin + c
    w2 = jnp.transpose(weight, (0, 2, 3, 1)).reshape(Cout, 9 * Cin)
    w2 = w2.astype(jnp.bfloat16)

    out_flat = pl.pallas_call(
        functools.partial(_blind_conv_kernel, H=H, Ws=Ws, Cin=Cin),
        out_shape=jax.ShapeDtypeStruct((N, Cout, H * Ws), x_nchw.dtype),
        grid=(N,),
        in_specs=[
            pl.BlockSpec((None, Cin, Lp), lambda n: (n, 0, 0)),
            pl.BlockSpec((Cout, 9 * Cin), lambda n: (0, 0)),
        ],
        out_specs=pl.BlockSpec((None, Cout, H * Ws), lambda n: (n, 0, 0)),
        scratch_shapes=[pltpu.VMEM((9 * Cin, H * Ws), jnp.bfloat16)],
        compiler_params=pltpu.CompilerParams(
            dimension_semantics=("parallel",)),
    )(x_flat, w2)

    # Drop the stride-slack columns and restore (N, Cout, H, W).
    return out_flat.reshape(N, Cout, H, Ws)[:, :, :, :W]


def _reference(x_nchw, weight):
    """Pure-JAX reference of the PyTorch forward (for the correctness check)."""
    xz = jnp.pad(x_nchw, ((0, 0), (0, 0), (1, 0), (0, 0)))              # ZeroPad2d((0,0,1,0))
    xr = jnp.pad(xz, ((0, 0), (0, 0), (1, 1), (1, 1)), mode="edge")     # ReplicationPad2d(1)
    y = lax.conv_general_dilated(
        xr, weight, window_strides=(1, 1), padding="VALID",
        dimension_numbers=("NCHW", "OIHW", "NCHW"))
    y = jnp.where(y >= 0, y, 0.1 * y)                                   # LeakyReLU(0.1)
    return y[:, :, :-1, :]                                              # crop last row


if __name__ == "__main__":
    key = jax.random.PRNGKey(0)
    kx, kw = jax.random.split(key)

    N, Cin, H, W = 2, 4, 16, 16
    Cout = 8

    x = jax.random.normal(kx, (N, Cin, H, W), dtype=jnp.float32)
    weight = jax.random.normal(kw, (Cout, Cin, 3, 3), dtype=jnp.float32) * 0.1

    out = jax.block_until_ready(blind_conv(x, weight))

    # The kernel feeds the MXU in bf16 (f32 accumulate); compare against the
    # f32 reference evaluated on bf16-rounded inputs so the check stays tight.
    xq = x.astype(jnp.bfloat16).astype(jnp.float32)
    wq = weight.astype(jnp.bfloat16).astype(jnp.float32)
    ref = _reference(xq, wq)

    assert out.shape == (N, Cout, H, W), out.shape
    err = float(jnp.max(jnp.abs(out - ref)))
    assert jnp.allclose(out, ref, atol=1e-3, rtol=1e-3), f"mismatch vs reference, max err {err}"

    print("KERNEL_OK")
</pallas_src>

<mosaic_0001>
module attributes {stable_mosaic.version = 11 : i64} {
  func.func @_blind_conv_kernel(%arg0: i32, %arg1: memref<1x4x456xbf16, #tpu.memory_space<vmem>>, %arg2: memref<8x36xbf16, #tpu.memory_space<vmem>>, %arg3: memref<1x8x384xf32, #tpu.memory_space<vmem>>, %arg4: memref<36x384xbf16, #tpu.memory_space<vmem>>) attributes {dimension_semantics = [#tpu.dimension_semantics<parallel>], iteration_bounds = array<i64: 2>, scalar_prefetch = 0 : i64, scratch_operands = 1 : i64, tpu.core_type = #tpu.core_type<tc>, window_params = [{transform_indices = @transform_0, window_bounds = array<i64: 1, 4, 456>}, {pipeline_mode = #tpu.pipeline_mode<synchronous>, transform_indices = @transform_1, window_bounds = array<i64: 8, 36>}, {transform_indices = @transform_2, window_bounds = array<i64: 1, 8, 384>}]} {
    %c0 = arith.constant 0 : index
    %c0_0 = arith.constant 0 : index
    %c0_1 = arith.constant 0 : index
    %0 = vector.load %arg1[%c0, %c0_0, %c0_1] : memref<1x4x456xbf16, #tpu.memory_space<vmem>>, vector<1x4x384xbf16>
    %1 = vector.shape_cast %0 : vector<1x4x384xbf16> to vector<4x384xbf16>
    %c0_2 = arith.constant 0 : index
    %c0_3 = arith.constant 0 : index
    %2 = vector.load %arg4[%c0_2, %c0_3] : memref<36x384xbf16, #tpu.memory_space<vmem>>, vector<4x384xbf16>
    tpu.vector_store %arg4[%c0_2, %c0_3], %1 {strides = array<i32>} : memref<36x384xbf16, #tpu.memory_space<vmem>>, vector<4x384xbf16>,
    %c0_4 = arith.constant 0 : index
    %c0_5 = arith.constant 0 : index
    %c1 = arith.constant 1 : index
    %3 = vector.load %arg1[%c0_4, %c0_5, %c1] : memref<1x4x456xbf16, #tpu.memory_space<vmem>>, vector<1x4x384xbf16>
    %4 = vector.shape_cast %3 : vector<1x4x384xbf16> to vector<4x384xbf16>
    %c4 = arith.constant 4 : index
    %c0_6 = arith.constant 0 : index
    %5 = vector.load %arg4[%c4, %c0_6] : memref<36x384xbf16, #tpu.memory_space<vmem>>, vector<4x384xbf16>
    tpu.vector_store %arg4[%c4, %c0_6], %4 {strides = array<i32>} : memref<36x384xbf16, #tpu.memory_space<vmem>>, vector<4x384xbf16>,
    %c0_7 = arith.constant 0 : index
    %c0_8 = arith.constant 0 : index
    %c2 = arith.constant 2 : index
    %6 = vector.load %arg1[%c0_7, %c0_8, %c2] : memref<1x4x456xbf16, #tpu.memory_space<vmem>>, vector<1x4x384xbf16>
    %7 = vector.shape_cast %6 : vector<1x4x384xbf16> to vector<4x384xbf16>
    %c8 = arith.constant 8 : index
    %c0_9 = arith.constant 0 : index
    %8 = vector.load %arg4[%c8, %c0_9] : memref<36x384xbf16, #tpu.memory_space<vmem>>, vector<4x384xbf16>
    tpu.vector_store %arg4[%c8, %c0_9], %7 {strides = array<i32>} : memref<36x384xbf16, #tpu.memory_space<vmem>>, vector<4x384xbf16>,
    %c0_10 = arith.constant 0 : index
    %c0_11 = arith.constant 0 : index
    %c24 = arith.constant 24 : index
    %9 = vector.load %arg1[%c0_10, %c0_11, %c24] : memref<1x4x456xbf16, #tpu.memory_space<vmem>>, vector<1x4x384xbf16>
    %10 = vector.shape_cast %9 : vector<1x4x384xbf16> to vector<4x384xbf16>
    %c12 = arith.constant 12 : index
    %c0_12 = arith.constant 0 : index
    %11 = vector.load %arg4[%c12, %c0_12] : memref<36x384xbf16, #tpu.memory_space<vmem>>, vector<4x384xbf16>
    tpu.vector_store %arg4[%c12, %c0_12], %10 {strides = array<i32>} : memref<36x384xbf16, #tpu.memory_space<vmem>>, vector<4x384xbf16>,
    %c0_13 = arith.constant 0 : index
    %c0_14 = arith.constant 0 : index
    %c25 = arith.constant 25 : index
    %12 = vector.load %arg1[%c0_13, %c0_14, %c25] : memref<1x4x456xbf16, #tpu.memory_space<vmem>>, vector<1x4x384xbf16>
    %13 = vector.shape_cast %12 : vector<1x4x384xbf16> to vector<4x384xbf16>
    %c16 = arith.constant 16 : index
    %c0_15 = arith.constant 0 : index
    %14 = vector.load %arg4[%c16, %c0_15] : memref<36x384xbf16, #tpu.memory_space<vmem>>, vector<4x384xbf16>
    tpu.vector_store %arg4[%c16, %c0_15], %13 {strides = array<i32>} : memref<36x384xbf16, #tpu.memory_space<vmem>>, vector<4x384xbf16>,
    %c0_16 = arith.constant 0 : index
    %c0_17 = arith.constant 0 : index
    %c26 = arith.constant 26 : index
    %15 = vector.load %arg1[%c0_16, %c0_17, %c26] : memref<1x4x456xbf16, #tpu.memory_space<vmem>>, vector<1x4x384xbf16>
    %16 = vector.shape_cast %15 : vector<1x4x384xbf16> to vector<4x384xbf16>
    %c20 = arith.constant 20 : index
    %c0_18 = arith.constant 0 : index
    %17 = vector.load %arg4[%c20, %c0_18] : memref<36x384xbf16, #tpu.memory_space<vmem>>, vector<4x384xbf16>
    tpu.vector_store %arg4[%c20, %c0_18], %16 {strides = array<i32>} : memref<36x384xbf16, #tpu.memory_space<vmem>>, vector<4x384xbf16>,
    %c0_19 = arith.constant 0 : index
    %c0_20 = arith.constant 0 : index
    %c48 = arith.constant 48 : index
    %18 = vector.load %arg1[%c0_19, %c0_20, %c48] : memref<1x4x456xbf16, #tpu.memory_space<vmem>>, vector<1x4x384xbf16>
    %19 = vector.shape_cast %18 : vector<1x4x384xbf16> to vector<4x384xbf16>
    %c24_21 = arith.constant 24 : index
    %c0_22 = arith.constant 0 : index
    %20 = vector.load %arg4[%c24_21, %c0_22] : memref<36x384xbf16, #tpu.memory_space<vmem>>, vector<4x384xbf16>
    tpu.vector_store %arg4[%c24_21, %c0_22], %19 {strides = array<i32>} : memref<36x384xbf16, #tpu.memory_space<vmem>>, vector<4x384xbf16>,
    %c0_23 = arith.constant 0 : index
    %c0_24 = arith.constant 0 : index
    %c49 = arith.constant 49 : index
    %21 = vector.load %arg1[%c0_23, %c0_24, %c49] : memref<1x4x456xbf16, #tpu.memory_space<vmem>>, vector<1x4x384xbf16>
    %22 = vector.shape_cast %21 : vector<1x4x384xbf16> to vector<4x384xbf16>
    %c28 = arith.constant 28 : index
    %c0_25 = arith.constant 0 : index
    %23 = vector.load %arg4[%c28, %c0_25] : memref<36x384xbf16, #tpu.memory_space<vmem>>, vector<4x384xbf16>
    tpu.vector_store %arg4[%c28, %c0_25], %22 {strides = array<i32>} : memref<36x384xbf16, #tpu.memory_space<vmem>>, vector<4x384xbf16>,
    %c0_26 = arith.constant 0 : index
    %c0_27 = arith.constant 0 : index
    %c50 = arith.constant 50 : index
    %24 = vector.load %arg1[%c0_26, %c0_27, %c50] : memref<1x4x456xbf16, #tpu.memory_space<vmem>>, vector<1x4x384xbf16>
    %25 = vector.shape_cast %24 : vector<1x4x384xbf16> to vector<4x384xbf16>
    %c32 = arith.constant 32 : index
    %c0_28 = arith.constant 0 : index
    %26 = vector.load %arg4[%c32, %c0_28] : memref<36x384xbf16, #tpu.memory_space<vmem>>, vector<4x384xbf16>
    tpu.vector_store %arg4[%c32, %c0_28], %25 {strides = array<i32>} : memref<36x384xbf16, #tpu.memory_space<vmem>>, vector<4x384xbf16>,
    %c0_29 = arith.constant 0 : index
    %c0_30 = arith.constant 0 : index
    %27 = vector.load %arg2[%c0_29, %c0_30] : memref<8x36xbf16, #tpu.memory_space<vmem>>, vector<8x36xbf16>
    %c0_31 = arith.constant 0 : index
    %c0_32 = arith.constant 0 : index
    %28 = vector.load %arg4[%c0_31, %c0_32] : memref<36x384xbf16, #tpu.memory_space<vmem>>, vector<36x384xbf16>
    %cst = arith.constant dense<0.000000e+00> : vector<8x384xf32>
    %29 = tpu.matmul %27, %28, %cst {dimension_numbers = #tpu.dot_dimension_numbers<[1], [0], [0], [1], [0, 0, 1, 1], [], []>} : vector<8x36xbf16>, vector<36x384xbf16>, vector<8x384xf32> -> vector<8x384xf32>
    %cst_33 = arith.constant 0.000000e+00 : f32
    %30 = vector.broadcast %cst_33 : f32 to vector<8x384xf32>
    %31 = arith.cmpf oge, %29, %30 : vector<8x384xf32>
    %cst_34 = arith.constant 1.000000e-01 : f32
    %32 = vector.broadcast %cst_34 : f32 to vector<8x384xf32>
    %33 = arith.mulf %32, %29 : vector<8x384xf32>
    %34 = arith.select %31, %29, %33 : vector<8x384xi1>, vector<8x384xf32>
    %c0_35 = arith.constant 0 : index
    %c0_36 = arith.constant 0 : index
    %c0_37 = arith.constant 0 : index
    %35 = vector.load %arg3[%c0_35, %c0_36, %c0_37] : memref<1x8x384xf32, #tpu.memory_space<vmem>>, vector<1x8x384xf32>
    %36 = vector.shape_cast %35 : vector<1x8x384xf32> to vector<8x384xf32>
    %37 = vector.shape_cast %34 : vector<8x384xf32> to vector<1x8x384xf32>
    tpu.vector_store %arg3[%c0_35, %c0_36, %c0_37], %37 {strides = array<i32>} : memref<1x8x384xf32, #tpu.memory_space<vmem>>, vector<1x8x384xf32>,
    return
  }
  func.func @transform_0(%arg0: i32) -> (i32, i32, i32) {
    %c0_i32 = arith.constant 0 : i32
    %c0_i32_0 = arith.constant 0 : i32
    %c0_i32_1 = arith.constant 0 : i32
    return %arg0, %c0_i32, %c0_i32_0 : i32, i32, i32
  }
  func.func @transform_1(%arg0: i32) -> (i32, i32) {
    %c0_i32 = arith.constant 0 : i32
    %c0_i32_0 = arith.constant 0 : i32
    %c0_i32_1 = arith.constant 0 : i32
    return %c0_i32, %c0_i32_0 : i32, i32
  }
  func.func @transform_2(%arg0: i32) -> (i32, i32, i32) {
    %c0_i32 = arith.constant 0 : i32
    %c0_i32_0 = arith.constant 0 : i32
    %c0_i32_1 = arith.constant 0 : i32
    return %arg0, %c0_i32, %c0_i32_0 : i32, i32, i32
  }
}

</mosaic_0001>

<llo_original>
// kernel: blind_conv.1
$region0: #{blind_conv.1}
  #allocation0 [shape = 'u32[]', space=smem, size = 0x4, offset = 0x4, fixed_abs, tag = 'smem constant byte address 0x4 - core index']
  #allocation1 [shape = 'u32[144,128]{1,0:T(1,128)}', space=vmem, size = 0x12000, scoped, tag = 'internal scratch']
  #allocation2 [shape = 'bf16[36,384]{1,0:T(8,128)(2,1)}', space=vmem, size = 0x7800, scoped, tag = 'scratch operand']
  %s0 = inlined_call_operand.vmem [shape: bf16[2,4,456], index: 0, kind: input, shape index: {}]
  %s1 = inlined_call_operand.vmem [shape: bf16[8,36], index: 1, kind: input, shape index: {}]
  %s2 = inlined_call_operand.vmem [shape: f32[2,8,384], index: 2, kind: output, shape index: {}]
  %s3 = sld [smem:[#allocation0]]
  $region41: #{blind_conv.1} parent=0
    _
  %s5 = ssub.s32 1, %s3
  %s6 = scalar_select 0, %s5, %s3
  loop: start=0, step=1, limit=4
  $region2: #{blind_conv.1} parent=0 // loop_pre_header
    _
  $region3: #{blind_conv.1} parent=0 // loop_header
    %s8 = sphi 0, %s12
    %p9 = scmp.ge.s32.totalorder %s8, 4
    %s18 = sphi 0, %s20
    %s21 = sphi 0, %s18
    %s22 = sphi 0, %s21
    %s38 = sphi 0, %s22
    %s42 = sphi 0, %s42
    %s44 = sphi 0, %s42
    %s45 = sphi 0, %s44
    %s59 = sphi 0, %s45
    %s65 = sphi 0, %s67
    %s68 = sphi 0, %s65
    %s69 = sphi 0, %s68
    %s85 = sphi 0, %s69
  $region4: #{blind_conv.1} parent=0 // loop_header_branch
    %11 = sbr.rel (%p9) target = $region8
  $region5: #{blind_conv.1} parent=0 // loop_body
    %s13 = ssub.s32 %s8, 1
    %s14 = ssub.s32 %s8, 2
    %s15 = sadd.s32 %s8, 1
    %s16 = ssub.s32 %s8, %s15
    %p17 = scmp.eq.s32.totalorder %s16, 0
    %s19 = sadd.s32 %s18, 1
    %s20 = scalar_select %p17, %s18, %s19
    %p23 = pneg %p17
    %p24 = scmp.eq.s32.totalorder %s8, 1
    %p25 = por %p23, %p24
    %p26 = scmp.ne.s32.totalorder %s18, %s21
    %p27 = scmp.eq.s32.totalorder %s8, 0
    %p28 = por %p26, %p27
    %p29 = scmp.ne.s32.totalorder %s18, %s21
    %p30 = scmp.eq.s32.totalorder %s13, 1
    %p31 = por %p29, %p30
    %p32 = scmp.ne.s32.totalorder %s21, %s22
    %p33 = scmp.eq.s32.totalorder %s13, 0
    %p34 = por %p32, %p33
    %p35 = scmp.ne.s32.totalorder %s21, %s22
    %p36 = scmp.eq.s32.totalorder %s14, 1
    %p37 = por %p35, %p36
    %p39 = scmp.ne.s32.totalorder %s22, %s38
    %p40 = scmp.eq.s32.totalorder %s14, 0
    %p41 = por %p39, %p40
    %s43 = sadd.s32 %s42, 1
    %p46 = scmp.eq.s32.totalorder %s8, 1
    %p47 = scmp.ne.s32.totalorder %s42, %s44
    %p48 = scmp.eq.s32.totalorder %s8, 0
    %p49 = por %p47, %p48
    %p50 = scmp.ne.s32.totalorder %s42, %s44
    %p51 = scmp.eq.s32.totalorder %s13, 1
    %p52 = por %p50, %p51
    %p53 = scmp.ne.s32.totalorder %s44, %s45
    %p54 = scmp.eq.s32.totalorder %s13, 0
    %p55 = por %p53, %p54
    %p56 = scmp.ne.s32.totalorder %s44, %s45
    %p57 = scmp.eq.s32.totalorder %s14, 1
    %p58 = por %p56, %p57
    %p60 = scmp.ne.s32.totalorder %s45, %s59
    %p61 = scmp.eq.s32.totalorder %s14, 0
    %p62 = por %p60, %p61
    %s63 = ssub.s32 %s8, %s15
    %p64 = scmp.eq.s32.totalorder %s63, 0
    %s66 = sadd.s32 %s65, 1
    %s67 = scalar_select %p64, %s65, %s66
    %p70 = pneg %p64
    %p71 = scmp.eq.s32.totalorder %s8, 1
    %p72 = por %p70, %p71
    %p73 = scmp.ne.s32.totalorder %s65, %s68
    %p74 = scmp.eq.s32.totalorder %s8, 0
    %p75 = por %p73, %p74
    %p76 = scmp.ne.s32.totalorder %s65, %s68
    %p77 = scmp.eq.s32.totalorder %s13, 1
    %p78 = por %p76, %p77
    %p79 = scmp.ne.s32.totalorder %s68, %s69
    %p80 = scmp.eq.s32.totalorder %s13, 0
    %p81 = por %p79, %p80
    %p82 = scmp.ne.s32.totalorder %s68, %s69
    %p83 = scmp.eq.s32.totalorder %s14, 1
    %p84 = por %p82, %p83
    %p86 = scmp.ne.s32.totalorder %s69, %s85
    %p87 = scmp.eq.s32.totalorder %s14, 0
    %p88 = por %p86, %p87
    %p89 = scmp.le.s32.totalorder 1, %s8
    %p90 = scmp.lt.s32.totalorder %s8, 3
    %p91 = pnand %p89, %p90
    %p92 = pneg %p91
    // Predicated region
    $region9: #{blind_conv.1} parent=5 // pred_check
      _
    $region10: #{blind_conv.1} parent=5 // pred_check_branch
      %94 = sbr.rel (%p91) target = $region12
    $region11: #{blind_conv.1} parent=5 // pred_region
      %s95 = ssub.s32 %s8, 1
      // Predicated region
      $region13: #{blind_conv.1} parent=11 // pred_check
        %p96 = pneg %p55
      $region14: #{blind_conv.1} parent=11 // pred_check_branch
        %98 = sbr.rel (%p96) target = $region16
      $region15: #{blind_conv.1} parent=11 // pred_region
        _
      $region16: #{blind_conv.1} parent=11 // pred_fallthru
        _
    $region12: #{blind_conv.1} parent=5 // pred_fallthru
      _
    %p99 = scmp.lt.s32.totalorder %s8, 2
    // Predicated region
    $region17: #{blind_conv.1} parent=5 // pred_check
      %p100 = pneg %p99
    $region18: #{blind_conv.1} parent=5 // pred_check_branch
      %102 = sbr.rel (%p100) target = $region20
    $region19: #{blind_conv.1} parent=5 // pred_region
      // Predicated region
      $region21: #{blind_conv.1} parent=19 // pred_check
        %p103 = pneg %p28
      $region22: #{blind_conv.1} parent=19 // pred_check_branch
        %105 = sbr.rel (%p103) target = $region24
      $region23: #{blind_conv.1} parent=19 // pred_region
        %p106 = scmp.lt.s32.totalorder %s8, 1
        %s107 = scalar_select %p106, %s8, 1
        %s108 = smul.addr %s107, 4
        %s109 = smul.addr %s108, 2
        %s110 = scalar_lea.vmem %s0, %s109
      $region24: #{blind_conv.1} parent=19 // pred_fallthru
        _
    $region20: #{blind_conv.1} parent=5 // pred_fallthru
      _
    %p111 = scmp.le.s32.totalorder 1, %s8
    %p112 = scmp.lt.s32.totalorder %s8, 3
    %p113 = pnand %p111, %p112
    %p114 = pneg %p113
    // Predicated region
    $region25: #{blind_conv.1} parent=5 // pred_check
      _
    $region26: #{blind_conv.1} parent=5 // pred_check_branch
      %116 = sbr.rel (%p113) target = $region28
    $region27: #{blind_conv.1} parent=5 // pred_region
      %s117 = ssub.s32 %s8, 1
      %p118 = scmp.lt.s32.totalorder %s13, 1
      %s119 = scalar_select %p118, %s13, 1
      %s120 = smul.addr %s119, 4
      %s121 = smul.addr %s120, 2
      %s122 = scalar_lea.vmem %s0, %s121
      %p123 = pneg %p34
      %p124 = pneg %p31
      %p125 = pneg %p55
      %p126 = pneg %p52
      %p127 = pneg %p81
      %p128 = pneg %p78
      %p129 = scmp.lt.s32.totalorder %s13, 1
      %s130 = scalar_select %p129, %s13, 1
      %s131 = smul.addr %s130, 3
      %s132 = smul.addr %s131, 8
      %s133 = scalar_lea.vmem %s2, %s132
      %p134 = scmp.lt.s32.totalorder %s13, 1
      %s135 = scalar_select %p134, %s13, 1
      %s136 = smul.addr %s135, 4
      %s137 = smul.addr %s136, 2
      %s138 = scalar_lea.vmem %s0, %s137
      %p139 = scmp.lt.s32.totalorder %s13, 1
      %s140 = scalar_select %p139, %s13, 1
      %s141 = smul.addr %s140, 3
      %s142 = smul.addr %s141, 8
      %s143 = scalar_lea.vmem %s2, %s142
      %v145 = vld [vmem:[%s138] sm:$0x3f]
      %v147 = vcombine.high %v145, %v145
      %v149 = vunpack.c.l.s4 1983009808
      %v150 = vunpack.c.0.s8 %v149
      %v151 = vlaneseq
      %v152 = vshrl.u32 %v151, 7
      %v153 = vsub.s32 %v150, %v152
      %v154 = vrot.slane %v145, %v153
      %v156 = vunpack.c.l.s4 1983009808
      %v157 = vunpack.c.0.s8 %v156
      %v158 = vlaneseq
      %v159 = vshrl.u32 %v158, 7
      %v160 = vsub.s32 %v157, %v159
      %v161 = vrot.slane %v147, %v160
      %164 = vst [vmem:[#allocation2] sm:$0x33] %v154
      %165 = vst [vmem:[#allocation2 + $0x8] sm:$0x3] %v161
      %v166 = vld [vmem:[%s138] sm:$0xff]
      %v168 = vcombine.low %v166, %v166
      %v170 = vunpack.c.l.s4 1983009808
      %v171 = vunpack.c.0.s8 %v170
      %v172 = vlaneseq
      %v173 = vshrl.u32 %v172, 7
      %v174 = vsub.s32 %v171, %v173
      %v175 = vrot.slane %v168, %v174
      %v177 = vunpack.c.l.s4 1983009808
      %v178 = vunpack.c.0.s8 %v177
      %v179 = vlaneseq
      %v180 = vshrl.u32 %v179, 7
      %v181 = vsub.s32 %v178, %v180
      %v182 = vrot.slane %v166, %v181
      %183 = vrot.lane.b32.xlu0 %v175, 127
      %v184 = vpop.permute.xlu0 %183
      %185 = vrot.lane.b32.xlu0 %v182, 127
      %v186 = vpop.permute.xlu0 %185
      %v187 = vrot.slane %v184, 4
      %v188 = vrot.slane %v186, 4
      %vm189 = vcmask 1043456
      %v190 = vsel %vm189, %v187, %v188
      %vm191 = vcmask 1039360
      %v192 = vsel %vm191, %v184, %v190
      %v193 = vsel %vm191, %v186, %v188
      %196 = vst [vmem:[#allocation2] sm:$0xcc] %v192
      %197 = vst [vmem:[#allocation2 + $0x8] sm:$0xc] %v193
      %v198 = vld [vmem:[%s138] sm:$0xff]
      %v200 = vcombine.high %v198, %v198
      %v202 = vunpack.c.l.s4 1983009808
      %v203 = vunpack.c.0.s8 %v202
      %v204 = vlaneseq
      %v205 = vshrl.u32 %v204, 7
      %v206 = vsub.s32 %v203, %v205
      %v207 = vrot.slane %v198, %v206
      %v209 = vunpack.c.l.s4 1983009808
      %v210 = vunpack.c.0.s8 %v209
      %v211 = vlaneseq
      %v212 = vshrl.u32 %v211, 7
      %v213 = vsub.s32 %v210, %v212
      %v214 = vrot.slane %v200, %v213
      %215 = vrot.lane.b32.xlu0 %v207, 126
      %v216 = vpop.permute.xlu0 %215
      %217 = vrot.lane.b32.xlu0 %v214, 126
      %v218 = vpop.permute.xlu0 %217
      %v219 = vrot.slane %v216, 4
      %v220 = vrot.slane %v218, 4
      %v221 = vsel %vm189, %v219, %v220
      %vm222 = vcmask 1031168
      %v223 = vsel %vm222, %v216, %v221
      %v224 = vsel %vm222, %v218, %v220
      %227 = vst [vmem:[#allocation2 + $0xc] sm:$0x33] %v223
      %228 = vst [vmem:[#allocation2 + $0x14] sm:$0x3] %v224
      %v229 = vld [vmem:[%s138] sm:$0xff]
      %v231 = vcombine.low %v229, %v229
      %v233 = vunpack.c.l.s4 1983009808
      %v234 = vunpack.c.0.s8 %v233
      %v235 = vlaneseq
      %v236 = vshrl.u32 %v235, 7
      %v237 = vsub.s32 %v234, %v236
      %v238 = vrot.slane %v231, %v237
      %v240 = vunpack.c.l.s4 1983009808
      %v241 = vunpack.c.0.s8 %v240
      %v242 = vlaneseq
      %v243 = vshrl.u32 %v242, 7
      %v244 = vsub.s32 %v241, %v243
      %v245 = vrot.slane %v229, %v244
      %246 = vrot.lane.b32.xlu0 %v238, 104
      %v247 = vpop.permute.xlu0 %246
      %248 = vrot.lane.b32.xlu0 %v245, 104
      %v249 = vpop.permute.xlu0 %248
      %v250 = vrot.slane %v247, 4
      %v251 = vrot.slane %v249, 4
      %v252 = vsel %vm189, %v250, %v251
      %vm253 = vcmask 850944
      %v254 = vsel %vm253, %v247, %v252
      %v255 = vsel %vm253, %v249, %v251
      %258 = vst [vmem:[#allocation2 + $0xc] sm:$0xcc] %v254
      %259 = vst [vmem:[#allocation2 + $0x14] sm:$0xc] %v255
      %v260 = vld [vmem:[%s138] sm:$0xff]
      %v262 = vcombine.high %v260, %v260
      %v264 = vunpack.c.l.s4 1983009808
      %v265 = vunpack.c.0.s8 %v264
      %v266 = vlaneseq
      %v267 = vshrl.u32 %v266, 7
      %v268 = vsub.s32 %v265, %v267
      %v269 = vrot.slane %v260, %v268
      %v271 = vunpack.c.l.s4 1983009808
      %v272 = vunpack.c.0.s8 %v271
      %v273 = vlaneseq
      %v274 = vshrl.u32 %v273, 7
      %v275 = vsub.s32 %v272, %v274
      %v276 = vrot.slane %v262, %v275
      %277 = vrot.lane.b32.xlu0 %v269, 103
      %v278 = vpop.permute.xlu0 %277
      %279 = vrot.lane.b32.xlu0 %v276, 103
      %v280 = vpop.permute.xlu0 %279
      %v281 = vrot.slane %v278, 4
      %v282 = vrot.slane %v280, 4
      %v283 = vsel %vm189, %v281, %v282
      %vm284 = vcmask 842752
      %v285 = vsel %vm284, %v278, %v283
      %v286 = vsel %vm284, %v280, %v282
      %289 = vst [vmem:[#allocation2 + $0x18] sm:$0x33] %v285
      %290 = vst [vmem:[#allocation2 + $0x20] sm:$0x3] %v286
      %v291 = vld [vmem:[%s138] sm:$0xff]
      %v293 = vcombine.low %v291, %v291
      %v295 = vunpack.c.l.s4 1983009808
      %v296 = vunpack.c.0.s8 %v295
      %v297 = vlaneseq
      %v298 = vshrl.u32 %v297, 7
      %v299 = vsub.s32 %v296, %v298
      %v300 = vrot.slane %v293, %v299
      %v302 = vunpack.c.l.s4 1983009808
      %v303 = vunpack.c.0.s8 %v302
      %v304 = vlaneseq
      %v305 = vshrl.u32 %v304, 7
      %v306 = vsub.s32 %v303, %v305
      %v307 = vrot.slane %v291, %v306
      %308 = vrot.lane.b32.xlu0 %v300, 102
      %v309 = vpop.permute.xlu0 %308
      %310 = vrot.lane.b32.xlu0 %v307, 102
      %v311 = vpop.permute.xlu0 %310
      %v312 = vrot.slane %v309, 4
      %v313 = vrot.slane %v311, 4
      %v314 = vsel %vm189, %v312, %v313
      %vm315 = vcmask 834560
      %v316 = vsel %vm315, %v309, %v314
      %v317 = vsel %vm315, %v311, %v313
      %320 = vst [vmem:[#allocation2 + $0x18] sm:$0xcc] %v316
      %321 = vst [vmem:[#allocation2 + $0x20] sm:$0xc] %v317
      %v322 = vld [vmem:[%s138] sm:$0xff]
      %v324 = vcombine.high %v322, %v322
      %v326 = vunpack.c.l.s4 1983009808
      %v327 = vunpack.c.0.s8 %v326
      %v328 = vlaneseq
      %v329 = vshrl.u32 %v328, 7
      %v330 = vsub.s32 %v327, %v329
      %v331 = vrot.slane %v322, %v330
      %v333 = vunpack.c.l.s4 1983009808
      %v334 = vunpack.c.0.s8 %v333
      %v335 = vlaneseq
      %v336 = vshrl.u32 %v335, 7
      %v337 = vsub.s32 %v334, %v336
      %v338 = vrot.slane %v324, %v337
      %339 = vrot.lane.b32.xlu0 %v331, 80
      %v340 = vpop.permute.xlu0 %339
      %341 = vrot.lane.b32.xlu0 %v338, 80
      %v342 = vpop.permute.xlu0 %341
      %v343 = vrot.slane %v340, 4
      %v344 = vrot.slane %v342, 4
      %v345 = vsel %vm189, %v343, %v344
      %vm346 = vcmask 654336
      %v347 = vsel %vm346, %v340, %v345
      %v348 = vsel %vm346, %v342, %v344
      %351 = vst [vmem:[#allocation2 + $0x24] sm:$0x33] %v347
      %352 = vst [vmem:[#allocation2 + $0x2c] sm:$0x3] %v348
      %v353 = vld [vmem:[%s138] sm:$0xff]
      %v355 = vcombine.low %v353, %v353
      %v357 = vunpack.c.l.s4 1983009808
      %v358 = vunpack.c.0.s8 %v357
      %v359 = vlaneseq
      %v360 = vshrl.u32 %v359, 7
      %v361 = vsub.s32 %v358, %v360
      %v362 = vrot.slane %v355, %v361
      %v364 = vunpack.c.l.s4 1983009808
      %v365 = vunpack.c.0.s8 %v364
      %v366 = vlaneseq
      %v367 = vshrl.u32 %v366, 7
      %v368 = vsub.s32 %v365, %v367
      %v369 = vrot.slane %v353, %v368
      %370 = vrot.lane.b32.xlu0 %v362, 79
      %v371 = vpop.permute.xlu0 %370
      %372 = vrot.lane.b32.xlu0 %v369, 79
      %v373 = vpop.permute.xlu0 %372
      %v374 = vrot.slane %v371, 4
      %v375 = vrot.slane %v373, 4
      %v376 = vsel %vm189, %v374, %v375
      %vm377 = vcmask 646144
      %v378 = vsel %vm377, %v371, %v376
      %v379 = vsel %vm377, %v373, %v375
      %382 = vst [vmem:[#allocation2 + $0x24] sm:$0xcc] %v378
      %383 = vst [vmem:[#allocation2 + $0x2c] sm:$0xc] %v379
      %v384 = vld [vmem:[%s138] sm:$0xff]
      %v386 = vcombine.high %v384, %v384
      %v388 = vunpack.c.l.s4 1983009808
      %v389 = vunpack.c.0.s8 %v388
      %v390 = vlaneseq
      %v391 = vshrl.u32 %v390, 7
      %v392 = vsub.s32 %v389, %v391
      %v393 = vrot.slane %v384, %v392
      %v395 = vunpack.c.l.s4 1983009808
      %v396 = vunpack.c.0.s8 %v395
      %v397 = vlaneseq
      %v398 = vshrl.u32 %v397, 7
      %v399 = vsub.s32 %v396, %v398
      %v400 = vrot.slane %v386, %v399
      %401 = vrot.lane.b32.xlu0 %v393, 78
      %v402 = vpop.permute.xlu0 %401
      %403 = vrot.lane.b32.xlu0 %v400, 78
      %v404 = vpop.permute.xlu0 %403
      %v405 = vrot.slane %v402, 4
      %v406 = vrot.slane %v404, 4
      %v407 = vsel %vm189, %v405, %v406
      %vm408 = vcmask 637952
      %v409 = vsel %vm408, %v402, %v407
      %v410 = vsel %vm408, %v404, %v406
      %413 = vst [vmem:[#allocation2 + $0x30] sm:$0x33] %v409
      %414 = vst [vmem:[#allocation2 + $0x38] sm:$0x3] %v410
      %v415 = vld [vmem:[%s1] sm:$0xf]
      %v416 = vld [vmem:[#allocation2] sm:$0xff]
      %v417 = vld [vmem:[#allocation2 + $0x8] sm:$0xf]
      %v418 = vld [vmem:[#allocation2 + $0xc] sm:$0xff]
      %v419 = vld [vmem:[#allocation2 + $0x14] sm:$0xf]
      %v420 = vld [vmem:[#allocation2 + $0x18] sm:$0xff]
      %v421 = vld [vmem:[#allocation2 + $0x20] sm:$0xf]
      %v422 = vld [vmem:[#allocation2 + $0x24] sm:$0xff]
      %v423 = vld [vmem:[#allocation2 + $0x2c] sm:$0xf]
      %v424 = vld [vmem:[#allocation2 + $0x30] sm:$0x33]
      %v425 = vld [vmem:[#allocation2 + $0x38] sm:$0x3]
      %v436 = vunpack.c.l.b16 %v416
      %v437 = vunpack.c.h.b16 %v416
      %v438 = vunpack.c.l.b16 %v417
      %v439 = vunpack.c.l.b16 %v418
      %v440 = vunpack.c.h.b16 %v418
      %v441 = vunpack.c.l.b16 %v419
      %v442 = vunpack.c.l.b16 %v420
      %v443 = vunpack.c.h.b16 %v420
      %v444 = vunpack.c.l.b16 %v421
      %v445 = vunpack.c.l.b16 %v422
      %v446 = vunpack.c.h.b16 %v422
      %v447 = vunpack.c.l.b16 %v423
      %v448 = vunpack.c.l.b16 %v424
      %v449 = vunpack.c.h.b16 %v424
      %v450 = vunpack.c.l.b16 %v425
      %v451 = vpack.c.b16 %v439, %v436
      %v452 = vpack.c.b16 %v440, %v437
      %v453 = vpack.c.b16 %v441, %v438
      %v454 = vpack.c.b16 %v445, %v442
      %v455 = vpack.c.b16 %v446, %v443
      %v456 = vpack.c.b16 %v447, %v444
      %v457 = vpack.c.b16 %v448, %v448
      %v458 = vpack.c.b16 %v449, %v449
      %v459 = vpack.c.b16 %v450, %v450
      %vm466 = vcmask 293888
      %v468 = vsel %vm466, %v415, 0
      %vm470 = vcmask 1041408
      %v472 = vsel %vm470, %v457, 0
      %v475 = vsel %vm470, %v458, 0
      %v478 = vsel %vm470, %v459, 0
      %480 = vmatprep.subr.bf16.mxu0 0
      %481 = vmatpush1.bf16.msra.mxu0 0
      %482 = vmatprep.subr.bf16.mxu0 0
      %483 = vmatpush1.bf16.msra.mxu0 0
      %484 = vmatprep.subr.bf16.mxu0 0
      %485 = vmatpush1.bf16.msra.mxu0 0
      %486 = vmatprep.subr.bf16.mxu0 0
      %487 = vmatpush1.bf16.msra.mxu0 0
      %488 = vmatprep.subr.bf16.mxu0 0
      %489 = vmatpush1.bf16.msra.mxu0 0
      %490 = vmatprep.subr.bf16.mxu0 %v475
      %491 = vmatpush1.bf16.msra.mxu0 %v472
      %492 = vmatprep.subr.bf16.mxu0 %v455
      %493 = vmatpush1.bf16.msra.mxu0 %v454
      %494 = vmatprep.subr.bf16.mxu0 %v452
      %495 = vmatpush1.bf16.msra.mxu0 %v451
      %496 = vmatprep.subr.bf16.mxu0 0
      %497 = vmatpush2.bf16.msra.mxu0 0
      %498 = vmatprep.subr.bf16.mxu0 0
      %499 = vmatpush2.bf16.msra.mxu0 0
      %500 = vmatprep.subr.bf16.mxu0 0
      %501 = vmatpush2.bf16.msra.mxu0 0
      %502 = vmatprep.subr.bf16.mxu0 0
      %503 = vmatpush2.bf16.msra.mxu0 0
      %504 = vmatprep.subr.bf16.mxu0 0
      %505 = vmatpush2.bf16.msra.mxu0 0
      %506 = vmatprep.subr.bf16.mxu0 0
      %507 = vmatpush2.bf16.msra.mxu0 0
      %508 = vmatprep.subr.bf16.mxu0 0
      %509 = vmatpush2.bf16.msra.mxu0 0
      %510 = vmatprep.subr.bf16.mxu0 0
      %511 = vmatpush2.bf16.msra.mxu0 0
      %512 = vmatprep.mubr.bf16.mxu0 0
      %513 = vmatmul.mubr.bf16.gmra.mxu0 %v468
      %v514 = vpop.f32.mrf.mxu0
      %v515 = vadd.f32 0.0, %v514
      %v516 = vpop.f32.mrf.mxu0
      %v517 = vadd.f32 0.0, %v516
      %v518 = vpop.f32.mrf.mxu0
      %v519 = vpop.f32.mrf.mxu0
      %520 = vdwg.mxu0
      %521 = vmatprep.subr.bf16.mxu0 0
      %522 = vmatpush1.bf16.msra.mxu0 0
      %523 = vmatprep.subr.bf16.mxu0 0
      %524 = vmatpush1.bf16.msra.mxu0 0
      %525 = vmatprep.subr.bf16.mxu0 0
      %526 = vmatpush1.bf16.msra.mxu0 0
      %527 = vmatprep.subr.bf16.mxu0 0
      %528 = vmatpush1.bf16.msra.mxu0 0
      %529 = vmatprep.subr.bf16.mxu0 0
      %530 = vmatpush1.bf16.msra.mxu0 0
      %531 = vmatprep.subr.bf16.mxu0 0
      %532 = vmatpush1.bf16.msra.mxu0 %v478
      %533 = vmatprep.subr.bf16.mxu0 0
      %534 = vmatpush1.bf16.msra.mxu0 %v456
      %535 = vmatprep.subr.bf16.mxu0 0
      %536 = vmatpush1.bf16.msra.mxu0 %v453
      %537 = vmatprep.subr.bf16.mxu0 0
      %538 = vmatpush2.bf16.msra.mxu0 0
      %539 = vmatprep.subr.bf16.mxu0 0
      %540 = vmatpush2.bf16.msra.mxu0 0
      %541 = vmatprep.subr.bf16.mxu0 0
      %542 = vmatpush2.bf16.msra.mxu0 0
      %543 = vmatprep.subr.bf16.mxu0 0
      %544 = vmatpush2.bf16.msra.mxu0 0
      %545 = vmatprep.subr.bf16.mxu0 0
      %546 = vmatpush2.bf16.msra.mxu0 0
      %547 = vmatprep.subr.bf16.mxu0 0
      %548 = vmatpush2.bf16.msra.mxu0 0
      %549 = vmatprep.subr.bf16.mxu0 0
      %550 = vmatpush2.bf16.msra.mxu0 0
      %551 = vmatprep.subr.bf16.mxu0 0
      %552 = vmatpush2.bf16.msra.mxu0 0
      %553 = vmatprep.mubr.bf16.mxu0 0
      %554 = vmatmul.mubr.bf16.gmra.mxu0 %v468
      %v555 = vpop.f32.mrf.mxu0
      %v556 = vadd.f32 0.0, %v555
      %v557 = vpop.f32.mrf.mxu0
      %v558 = vpop.f32.mrf.mxu0
      %v559 = vpop.f32.mrf.mxu0
      %560 = vdwg.mxu0
      %vm561 = vcmp.ge.f32.partialorder %v515, 0.0
      %vm562 = vcmp.ge.f32.partialorder %v517, 0.0
      %vm563 = vcmp.ge.f32.partialorder %v556, 0.0
      %v564 = vmul.f32 %v515, 0.1
      %v565 = vmul.f32 %v517, 0.1
      %v566 = vmul.f32 %v556, 0.1
      %v567 = vsel %vm561, %v515, %v564
      %v568 = vsel %vm562, %v517, %v565
      %v569 = vsel %vm563, %v556, %v566
      %570 = vst [vmem:[%s143] sm:$0xff] %v567
      %571 = vst [vmem:[%s143 + $0x8] sm:$0xff] %v568
      %572 = vst [vmem:[%s143 + $0x10] sm:$0xff] %v569
      %p573 = scmp.lt.s32.totalorder %s13, 1
      %s574 = scalar_select %p573, %s13, 1
      %s575 = smul.addr %s574, 3
      %s576 = smul.addr %s575, 8
      %s577 = scalar_lea.vmem %s2, %s576
      // Predicated region
      $region29: #{blind_conv.1} parent=27 // pred_check
        %p578 = pneg %p78
      $region30: #{blind_conv.1} parent=27 // pred_check_branch
        %580 = sbr.rel (%p578) target = $region32
      $region31: #{blind_conv.1} parent=27 // pred_region
        _
      $region32: #{blind_conv.1} parent=27 // pred_fallthru
        _
    $region28: #{blind_conv.1} parent=5 // pred_fallthru
      _
    %p581 = scmp.le.s32.totalorder 2, %s8
    // Predicated region
    $region33: #{blind_conv.1} parent=5 // pred_check
      %p582 = pneg %p581
    $region34: #{blind_conv.1} parent=5 // pred_check_branch
      %584 = sbr.rel (%p582) target = $region36
    $region35: #{blind_conv.1} parent=5 // pred_region
      %s585 = ssub.s32 %s8, 2
      // Predicated region
      $region37: #{blind_conv.1} parent=35 // pred_check
        %p586 = pneg %p84
      $region38: #{blind_conv.1} parent=35 // pred_check_branch
        %588 = sbr.rel (%p586) target = $region40
      $region39: #{blind_conv.1} parent=35 // pred_region
        %p589 = scmp.lt.s32.totalorder %s14, 1
        %s590 = scalar_select %p589, %s14, 1
        %s591 = smul.addr %s590, 3
        %s592 = smul.addr %s591, 8
        %s593 = scalar_lea.vmem %s2, %s592
      $region40: #{blind_conv.1} parent=35 // pred_fallthru
        _
    $region36: #{blind_conv.1} parent=5 // pred_fallthru
      _
  $region6: #{blind_conv.1} parent=0 // loop_footer
    %s12 = sadd.s32 1, %s8
  $region7: #{blind_conv.1} parent=0 // loop_footer_branch
    %7 = sbr.rel target = $region3
  $region8: #{blind_conv.1} parent=0 // loop_exit
    _

</llo_original>
